<compile_context>
chip_gen: v5e
topology: v5e:2x2
jax: 0.10.0
libtpu: 0.0.40
codegen_flags: <defaults>
</compile_context>

<pallas_src>
import functools

import jax
import jax.numpy as jnp
from jax.experimental import pallas as pl
from jax.experimental.pallas import tpu as pltpu


def _resblock_kernel(x_ref, w1_ref, b1_ref, w2_ref, b2_ref, o_ref, *, H, W):
    # Block shapes (per grid step = one batch element):
    #   x_ref  : (1, C,  H*W)   input, channels on sublanes, pixels on lanes
    #   w1_ref : (Co, 9*C)      conv1 weights, column index = (ky*3+kx)*C + cin
    #   b1_ref : (Co, 1)        conv1 bias (f32)
    #   w2_ref : (Co, 9*Co)     conv2 weights
    #   b2_ref : (Co, 1)        conv2 bias (f32)
    #   o_ref  : (1, Co, H*W)   output (lane-dense stores)
    HW = H * W
    mxu_dtype = w1_ref.dtype

    # Column-boundary masks (bool), shared by both convs: pixels whose
    # left / right neighbour would wrap into the previous / next image row.
    col = jax.lax.broadcasted_iota(jnp.int32, (1, HW), 1) % W
    has_left = col != 0          # dx = -1 tap is valid
    has_right = col != (W - 1)   # dx = +1 tap is valid

    def conv3x3_bias_relu(a, w_ref, b_ref):
        """a: (Cin, HW) in MXU dtype -> (Co, HW) f32 with bias + ReLU applied.

        3x3 SAME conv accumulated as 3 matmuls of depth K = 3*Cin (one per dy).
        """
        cin = a.shape[0]
        # Horizontal taps: shift one lane via a 1-column zero pad, then zero
        # the wrapped column with a bit-select (no float multiply).
        zc = jnp.zeros((cin, 1), a.dtype)
        ah = jnp.concatenate([zc, a, zc], axis=1)             # (Cin, HW+2)
        a_left = jnp.where(has_left, ah[:, 0:HW], 0)          # out[p] = a[p-1]
        a_right = jnp.where(has_right, ah[:, 2:2 + HW], 0)    # out[p] = a[p+1]
        # Stack the three dx taps once (dx = -1, 0, +1 matches the weight
        # column order kx = 0, 1, 2), lane-pad by W zeros on each side so the
        # dy = +/-1 shifts are pure slices (vertical OOB reads the zero pad).
        stacked = jnp.concatenate([a_left, a, a_right], axis=0)   # (3Cin, HW)
        zw = jnp.zeros((3 * cin, W), a.dtype)
        sp = jnp.concatenate([zw, stacked, zw], axis=1)        # (3Cin, HW+2W)

        acc = None
        for ky in range(3):                                    # dy = ky - 1
            start = ky * W                                     # = W + dy*W
            tap = sp[:, start:start + HW]                      # (3Cin, HW)
            wk = w_ref[:, ky * 3 * cin:(ky + 1) * 3 * cin]     # (Co, 3Cin)
            part = jnp.dot(wk, tap, preferred_element_type=jnp.float32)
            acc = part if acc is None else acc + part
        return jnp.maximum(acc + b_ref[...], 0.0)              # (Co, HW) f32

    x_in = x_ref[0]                                            # (C, HW)
    x_res = x_in.astype(jnp.float32)                           # residual, f32

    h1 = conv3x3_bias_relu(x_in.astype(mxu_dtype), w1_ref, b1_ref)
    h2 = conv3x3_bias_relu(h1.astype(mxu_dtype), w2_ref, b2_ref)

    # InstanceNorm2d (affine=False), two-pass stats in f32 (no cancellation).
    inv_hw = jnp.float32(1.0 / HW)
    mean = jnp.sum(h2, axis=1, keepdims=True) * inv_hw         # (Co, 1)
    cen = h2 - mean
    var = jnp.sum(cen * cen, axis=1, keepdims=True) * inv_hw
    hn = cen * jax.lax.rsqrt(var + jnp.float32(1e-5))

    # Residual add in f32, lane-dense store.
    o_ref[0] = (hn + x_res).astype(o_ref.dtype)


def _vmem_limit_bytes(C, Co, H, W, x_itemsize, out_itemsize, mxu_itemsize):
    """Explicit scoped-VMEM budget from the actual block + intermediate set."""
    HW = H * W
    io = 2 * (C * HW * x_itemsize + Co * HW * out_itemsize)        # 2x-buffered x / out
    wts = 2 * ((9 * C * Co + 9 * Co * Co) * mxu_itemsize + 2 * Co * 4)
    # Peak intermediates (conv2 phase): h1 f32 + h1 MXU-dtype copy +
    # stacked / padded slabs + f32 accumulator + f32 residual copy of x.
    interm = (Co * HW * 4
              + Co * HW * mxu_itemsize
              + 2 * 3 * Co * (HW + 2 * W) * mxu_itemsize
              + 2 * Co * HW * 4
              + C * HW * 4)
    est = io + wts + interm
    return int(min(max(2 * est, 4 * 1024 * 1024), 64 * 1024 * 1024))


@functools.partial(jax.jit, static_argnames=("mxu_dtype",))
def resblock_forward(x_nchw, w1_hwio, b1, w2_hwio, b2, *, mxu_dtype=jnp.bfloat16):
    """ResBlock forward.

    x_nchw : (N, C, H, W) (PyTorch layout).  bf16 input is accepted (halves
             the dominant HBM traffic); residual math stays f32 in-kernel.
    w1_hwio: (3, 3, C,  Co) conv1 weight (HWIO); w2_hwio: (3, 3, Co, Co).
    b1, b2 : (Co,) biases.
    mxu_dtype: operand dtype for the conv matmuls (accumulation is always f32;
               all elementwise math is f32).
    """
    N, C, H, W = x_nchw.shape
    Co = w1_hwio.shape[-1]
    assert Co == C, "residual add requires d_model == d_model_out"
    HW = H * W

    # Free reshape: NCHW is contiguous over (H, W) -> lane-dense (C, H*W).
    x = x_nchw.reshape(N, C, HW)

    # HWIO -> (Co, 9*Cin); column index = (ky*3 + kx)*Cin + cin.
    w1m = jnp.transpose(w1_hwio, (3, 0, 1, 2)).reshape(Co, 9 * C).astype(mxu_dtype)
    w2m = jnp.transpose(w2_hwio, (3, 0, 1, 2)).reshape(Co, 9 * Co).astype(mxu_dtype)
    b1r = b1.reshape(Co, 1).astype(jnp.float32)
    b2r = b2.reshape(Co, 1).astype(jnp.float32)

    kernel = functools.partial(_resblock_kernel, H=H, W=W)
    vmem_limit = _vmem_limit_bytes(
        C, Co, H, W, x.dtype.itemsize, x_nchw.dtype.itemsize,
        jnp.dtype(mxu_dtype).itemsize)

    out = pl.pallas_call(
        kernel,
        out_shape=jax.ShapeDtypeStruct((N, Co, HW), x_nchw.dtype),
        grid_spec=pltpu.PrefetchScalarGridSpec(
            num_scalar_prefetch=0,
            grid=(N,),
            in_specs=[
                pl.BlockSpec((1, C, HW), lambda n: (n, 0, 0)),
                pl.BlockSpec((Co, 9 * C), lambda n: (0, 0)),
                pl.BlockSpec((Co, 1), lambda n: (0, 0)),
                pl.BlockSpec((Co, 9 * Co), lambda n: (0, 0)),
                pl.BlockSpec((Co, 1), lambda n: (0, 0)),
            ],
            out_specs=pl.BlockSpec((1, Co, HW), lambda n: (n, 0, 0)),
        ),
        compiler_params=pltpu.CompilerParams(
            dimension_semantics=("parallel",),
            vmem_limit_bytes=vmem_limit,
        ),
    )(x, w1m, b1r, w2m, b2r)

    return out.reshape(N, Co, H, W)


def _reference_forward(x_nchw, w1_hwio, b1, w2_hwio, b2):
    """Pure-JAX reference (same math as the PyTorch module), all f32."""
    x = jnp.transpose(x_nchw, (0, 2, 3, 1))
    dn = jax.lax.conv_dimension_numbers(x.shape, w1_hwio.shape, ("NHWC", "HWIO", "NHWC"))
    h1 = jax.lax.conv_general_dilated(x, w1_hwio, (1, 1), "SAME", dimension_numbers=dn)
    h1 = jnp.maximum(h1 + b1.reshape(1, 1, 1, -1), 0.0)
    h2 = jax.lax.conv_general_dilated(h1, w2_hwio, (1, 1), "SAME", dimension_numbers=dn)
    h2 = jnp.maximum(h2 + b2.reshape(1, 1, 1, -1), 0.0)
    mean = jnp.mean(h2, axis=(1, 2), keepdims=True)
    var = jnp.mean(jnp.square(h2 - mean), axis=(1, 2), keepdims=True)
    hn = (h2 - mean) / jnp.sqrt(var + 1e-5)
    return jnp.transpose(hn + x, (0, 3, 1, 2))


if __name__ == "__main__":
    # d_model == d_model_out is required by the residual add in the module.
    N, C, H, W = 2, 4, 16, 16
    d_model = d_model_out = C

    key = jax.random.PRNGKey(0)
    kx, kw1, kb1, kw2, kb2 = jax.random.split(key, 5)

    x = jax.random.normal(kx, (N, C, H, W), dtype=jnp.float32)
    w1 = 0.1 * jax.random.normal(kw1, (3, 3, d_model, d_model_out), dtype=jnp.float32)
    b1 = 0.1 * jax.random.normal(kb1, (d_model_out,), dtype=jnp.float32)
    w2 = 0.1 * jax.random.normal(kw2, (3, 3, d_model_out, d_model_out), dtype=jnp.float32)
    b2 = 0.1 * jax.random.normal(kb2, (d_model_out,), dtype=jnp.float32)

    ref = jax.block_until_ready(_reference_forward(x, w1, b1, w2, b2))

    # f32 MXU path: tight check of the tap / layout / norm logic.
    out_f32 = jax.block_until_ready(
        resblock_forward(x, w1, b1, w2, b2, mxu_dtype=jnp.float32))
    assert out_f32.shape == (N, C, H, W)
    assert jnp.allclose(out_f32, ref, atol=1e-4, rtol=1e-4), (
        float(jnp.max(jnp.abs(out_f32 - ref))))

    # bf16 MXU path (default, fast): f32 accumulation, looser tolerance.
    out_bf16 = jax.block_until_ready(resblock_forward(x, w1, b1, w2, b2))
    assert out_bf16.shape == (N, C, H, W)
    assert jnp.allclose(out_bf16, ref, atol=5e-2, rtol=5e-2), (
        float(jnp.max(jnp.abs(out_bf16 - ref))))

    print("KERNEL_OK")
</pallas_src>

<mosaic_0001>
module attributes {stable_mosaic.version = 11 : i64} {
  func.func @_resblock_kernel(%arg0: i32, %arg1: memref<1x4x256xf32, #tpu.memory_space<vmem>>, %arg2: memref<4x36xf32, #tpu.memory_space<vmem>>, %arg3: memref<4x1xf32, #tpu.memory_space<vmem>>, %arg4: memref<4x36xf32, #tpu.memory_space<vmem>>, %arg5: memref<4x1xf32, #tpu.memory_space<vmem>>, %arg6: memref<1x4x256xf32, #tpu.memory_space<vmem>>) attributes {dimension_semantics = [#tpu.dimension_semantics<parallel>], iteration_bounds = array<i64: 2>, scalar_prefetch = 0 : i64, scratch_operands = 0 : i64, tpu.core_type = #tpu.core_type<tc>, window_params = [{transform_indices = @transform_0, window_bounds = array<i64: 1, 4, 256>}, {pipeline_mode = #tpu.pipeline_mode<synchronous>, transform_indices = @transform_1, window_bounds = array<i64: 4, 36>}, {pipeline_mode = #tpu.pipeline_mode<synchronous>, transform_indices = @transform_2, window_bounds = array<i64: 4, 1>}, {pipeline_mode = #tpu.pipeline_mode<synchronous>, transform_indices = @transform_3, window_bounds = array<i64: 4, 36>}, {pipeline_mode = #tpu.pipeline_mode<synchronous>, transform_indices = @transform_4, window_bounds = array<i64: 4, 1>}, {transform_indices = @transform_5, window_bounds = array<i64: 1, 4, 256>}]} {
    %0 = tpu.iota {dimensions = array<i32: 1>} : vector<1x256xi32>
    %c16_i32 = arith.constant 16 : i32
    %c0_i32 = arith.constant 0 : i32
    %1 = arith.cmpi eq, %c16_i32, %c0_i32 : i32
    %c1_i32 = arith.constant 1 : i32
    %2 = arith.select %1, %c1_i32, %c16_i32 : i32
    %3 = vector.broadcast %2 : i32 to vector<1x256xi32>
    %4 = arith.remsi %0, %3 : vector<1x256xi32>
    %c0_i32_0 = arith.constant 0 : i32
    %5 = vector.broadcast %c0_i32_0 : i32 to vector<1x256xi32>
    %6 = arith.cmpi ne, %4, %5 : vector<1x256xi32>
    %c0_i32_1 = arith.constant 0 : i32
    %7 = vector.broadcast %c0_i32_1 : i32 to vector<1x256xi32>
    %8 = arith.cmpi slt, %4, %7 : vector<1x256xi32>
    %c0_i32_2 = arith.constant 0 : i32
    %9 = arith.cmpi slt, %2, %c0_i32_2 : i32
    %10 = vector.broadcast %9 : i1 to vector<1x256xi1>
    %11 = vector.broadcast %10 : vector<1x256xi1> to vector<1x256xi1>
    %12 = arith.xori %8, %11 : vector<1x256xi1>
    %13 = arith.andi %12, %6 : vector<1x256xi1>
    %14 = vector.broadcast %2 : i32 to vector<1x256xi32>
    %15 = arith.addi %4, %14 : vector<1x256xi32>
    %16 = arith.select %13, %15, %4 : vector<1x256xi1>, vector<1x256xi32>
    %c0_i32_3 = arith.constant 0 : i32
    %17 = vector.broadcast %c0_i32_3 : i32 to vector<1x256xi32>
    %18 = arith.cmpi ne, %16, %17 : vector<1x256xi32>
    %c15_i32 = arith.constant 15 : i32
    %19 = vector.broadcast %c15_i32 : i32 to vector<1x256xi32>
    %20 = arith.cmpi ne, %16, %19 : vector<1x256xi32>
    %c0 = arith.constant 0 : index
    %c0_4 = arith.constant 0 : index
    %c0_5 = arith.constant 0 : index
    %21 = vector.load %arg1[%c0, %c0_4, %c0_5] : memref<1x4x256xf32, #tpu.memory_space<vmem>>, vector<1x4x256xf32>
    %22 = vector.shape_cast %21 : vector<1x4x256xf32> to vector<4x256xf32>
    %cst = arith.constant 0.000000e+00 : f32
    %23 = vector.broadcast %cst : f32 to vector<4x1xf32>
    %24 = tpu.concatenate %23, %22, %23 in 1 : vector<4x1xf32>, vector<4x256xf32>, vector<4x1xf32> -> vector<4x258xf32>
    %25 = vector.extract_strided_slice %24 {offsets = [0, 0], sizes = [4, 256], strides = [1, 1]} : vector<4x258xf32> to vector<4x256xf32>
    %c0_i32_6 = arith.constant 0 : i32
    %26 = arith.sitofp %c0_i32_6 : i32 to f32
    %27 = vector.shape_cast %18 : vector<1x256xi1> to vector<1x256xi1>
    %28 = vector.broadcast %27 : vector<1x256xi1> to vector<4x256xi1>
    %29 = vector.broadcast %26 : f32 to vector<4x256xf32>
    %30 = arith.select %28, %25, %29 : vector<4x256xi1>, vector<4x256xf32>
    %31 = vector.extract_strided_slice %24 {offsets = [0, 2], sizes = [4, 256], strides = [1, 1]} : vector<4x258xf32> to vector<4x256xf32>
    %c0_i32_7 = arith.constant 0 : i32
    %32 = arith.sitofp %c0_i32_7 : i32 to f32
    %33 = vector.shape_cast %20 : vector<1x256xi1> to vector<1x256xi1>
    %34 = vector.broadcast %33 : vector<1x256xi1> to vector<4x256xi1>
    %35 = vector.broadcast %32 : f32 to vector<4x256xf32>
    %36 = arith.select %34, %31, %35 : vector<4x256xi1>, vector<4x256xf32>
    %37 = tpu.concatenate %30, %22, %36 in 0 : vector<4x256xf32>, vector<4x256xf32>, vector<4x256xf32> -> vector<12x256xf32>
    %cst_8 = arith.constant 0.000000e+00 : f32
    %38 = vector.broadcast %cst_8 : f32 to vector<12x16xf32>
    %39 = tpu.concatenate %38, %37, %38 in 1 : vector<12x16xf32>, vector<12x256xf32>, vector<12x16xf32> -> vector<12x288xf32>
    %40 = vector.extract_strided_slice %39 {offsets = [0, 0], sizes = [12, 256], strides = [1, 1]} : vector<12x288xf32> to vector<12x256xf32>
    %c0_9 = arith.constant 0 : index
    %c0_10 = arith.constant 0 : index
    %41 = vector.load %arg2[%c0_9, %c0_10] : memref<4x36xf32, #tpu.memory_space<vmem>>, vector<4x12xf32>
    %cst_11 = arith.constant dense<0.000000e+00> : vector<4x256xf32>
    %42 = tpu.matmul %41, %40, %cst_11 {dimension_numbers = #tpu.dot_dimension_numbers<[1], [0], [0], [1], [0, 0, 1, 1], [], []>} : vector<4x12xf32>, vector<12x256xf32>, vector<4x256xf32> -> vector<4x256xf32>
    %43 = vector.extract_strided_slice %39 {offsets = [0, 16], sizes = [12, 256], strides = [1, 1]} : vector<12x288xf32> to vector<12x256xf32>
    %c0_12 = arith.constant 0 : index
    %c12 = arith.constant 12 : index
    %44 = vector.load %arg2[%c0_12, %c12] : memref<4x36xf32, #tpu.memory_space<vmem>>, vector<4x12xf32>
    %cst_13 = arith.constant dense<0.000000e+00> : vector<4x256xf32>
    %45 = tpu.matmul %44, %43, %cst_13 {dimension_numbers = #tpu.dot_dimension_numbers<[1], [0], [0], [1], [0, 0, 1, 1], [], []>} : vector<4x12xf32>, vector<12x256xf32>, vector<4x256xf32> -> vector<4x256xf32>
    %46 = arith.addf %42, %45 : vector<4x256xf32>
    %47 = vector.extract_strided_slice %39 {offsets = [0, 32], sizes = [12, 256], strides = [1, 1]} : vector<12x288xf32> to vector<12x256xf32>
    %c0_14 = arith.constant 0 : index
    %c24 = arith.constant 24 : index
    %48 = vector.load %arg2[%c0_14, %c24] : memref<4x36xf32, #tpu.memory_space<vmem>>, vector<4x12xf32>
    %cst_15 = arith.constant dense<0.000000e+00> : vector<4x256xf32>
    %49 = tpu.matmul %48, %47, %cst_15 {dimension_numbers = #tpu.dot_dimension_numbers<[1], [0], [0], [1], [0, 0, 1, 1], [], []>} : vector<4x12xf32>, vector<12x256xf32>, vector<4x256xf32> -> vector<4x256xf32>
    %50 = arith.addf %46, %49 : vector<4x256xf32>
    %c0_16 = arith.constant 0 : index
    %c0_17 = arith.constant 0 : index
    %51 = vector.load %arg3[%c0_16, %c0_17] : memref<4x1xf32, #tpu.memory_space<vmem>>, vector<4x1xf32>
    %52 = vector.broadcast %51 : vector<4x1xf32> to vector<4x256xf32>
    %53 = arith.addf %50, %52 : vector<4x256xf32>
    %cst_18 = arith.constant 0.000000e+00 : f32
    %54 = vector.broadcast %cst_18 : f32 to vector<4x256xf32>
    %55 = arith.maximumf %53, %54 : vector<4x256xf32>
    %cst_19 = arith.constant 0.000000e+00 : f32
    %56 = vector.broadcast %cst_19 : f32 to vector<4x1xf32>
    %57 = tpu.concatenate %56, %55, %56 in 1 : vector<4x1xf32>, vector<4x256xf32>, vector<4x1xf32> -> vector<4x258xf32>
    %58 = vector.extract_strided_slice %57 {offsets = [0, 0], sizes = [4, 256], strides = [1, 1]} : vector<4x258xf32> to vector<4x256xf32>
    %c0_i32_20 = arith.constant 0 : i32
    %59 = arith.sitofp %c0_i32_20 : i32 to f32
    %60 = vector.shape_cast %18 : vector<1x256xi1> to vector<1x256xi1>
    %61 = vector.broadcast %60 : vector<1x256xi1> to vector<4x256xi1>
    %62 = vector.broadcast %59 : f32 to vector<4x256xf32>
    %63 = arith.select %61, %58, %62 : vector<4x256xi1>, vector<4x256xf32>
    %64 = vector.extract_strided_slice %57 {offsets = [0, 2], sizes = [4, 256], strides = [1, 1]} : vector<4x258xf32> to vector<4x256xf32>
    %c0_i32_21 = arith.constant 0 : i32
    %65 = arith.sitofp %c0_i32_21 : i32 to f32
    %66 = vector.shape_cast %20 : vector<1x256xi1> to vector<1x256xi1>
    %67 = vector.broadcast %66 : vector<1x256xi1> to vector<4x256xi1>
    %68 = vector.broadcast %65 : f32 to vector<4x256xf32>
    %69 = arith.select %67, %64, %68 : vector<4x256xi1>, vector<4x256xf32>
    %70 = tpu.concatenate %63, %55, %69 in 0 : vector<4x256xf32>, vector<4x256xf32>, vector<4x256xf32> -> vector<12x256xf32>
    %cst_22 = arith.constant 0.000000e+00 : f32
    %71 = vector.broadcast %cst_22 : f32 to vector<12x16xf32>
    %72 = tpu.concatenate %71, %70, %71 in 1 : vector<12x16xf32>, vector<12x256xf32>, vector<12x16xf32> -> vector<12x288xf32>
    %73 = vector.extract_strided_slice %72 {offsets = [0, 0], sizes = [12, 256], strides = [1, 1]} : vector<12x288xf32> to vector<12x256xf32>
    %c0_23 = arith.constant 0 : index
    %c0_24 = arith.constant 0 : index
    %74 = vector.load %arg4[%c0_23, %c0_24] : memref<4x36xf32, #tpu.memory_space<vmem>>, vector<4x12xf32>
    %cst_25 = arith.constant dense<0.000000e+00> : vector<4x256xf32>
    %75 = tpu.matmul %74, %73, %cst_25 {dimension_numbers = #tpu.dot_dimension_numbers<[1], [0], [0], [1], [0, 0, 1, 1], [], []>} : vector<4x12xf32>, vector<12x256xf32>, vector<4x256xf32> -> vector<4x256xf32>
    %76 = vector.extract_strided_slice %72 {offsets = [0, 16], sizes = [12, 256], strides = [1, 1]} : vector<12x288xf32> to vector<12x256xf32>
    %c0_26 = arith.constant 0 : index
    %c12_27 = arith.constant 12 : index
    %77 = vector.load %arg4[%c0_26, %c12_27] : memref<4x36xf32, #tpu.memory_space<vmem>>, vector<4x12xf32>
    %cst_28 = arith.constant dense<0.000000e+00> : vector<4x256xf32>
    %78 = tpu.matmul %77, %76, %cst_28 {dimension_numbers = #tpu.dot_dimension_numbers<[1], [0], [0], [1], [0, 0, 1, 1], [], []>} : vector<4x12xf32>, vector<12x256xf32>, vector<4x256xf32> -> vector<4x256xf32>
    %79 = arith.addf %75, %78 : vector<4x256xf32>
    %80 = vector.extract_strided_slice %72 {offsets = [0, 32], sizes = [12, 256], strides = [1, 1]} : vector<12x288xf32> to vector<12x256xf32>
    %c0_29 = arith.constant 0 : index
    %c24_30 = arith.constant 24 : index
    %81 = vector.load %arg4[%c0_29, %c24_30] : memref<4x36xf32, #tpu.memory_space<vmem>>, vector<4x12xf32>
    %cst_31 = arith.constant dense<0.000000e+00> : vector<4x256xf32>
    %82 = tpu.matmul %81, %80, %cst_31 {dimension_numbers = #tpu.dot_dimension_numbers<[1], [0], [0], [1], [0, 0, 1, 1], [], []>} : vector<4x12xf32>, vector<12x256xf32>, vector<4x256xf32> -> vector<4x256xf32>
    %83 = arith.addf %79, %82 : vector<4x256xf32>
    %c0_32 = arith.constant 0 : index
    %c0_33 = arith.constant 0 : index
    %84 = vector.load %arg5[%c0_32, %c0_33] : memref<4x1xf32, #tpu.memory_space<vmem>>, vector<4x1xf32>
    %85 = vector.broadcast %84 : vector<4x1xf32> to vector<4x256xf32>
    %86 = arith.addf %83, %85 : vector<4x256xf32>
    %cst_34 = arith.constant 0.000000e+00 : f32
    %87 = vector.broadcast %cst_34 : f32 to vector<4x256xf32>
    %88 = arith.maximumf %86, %87 : vector<4x256xf32>
    %cst_35 = arith.constant dense<0.000000e+00> : vector<4xf32>
    %89 = vector.multi_reduction <add>, %88, %cst_35 [1] : vector<4x256xf32> to vector<4xf32>
    %90 = vector.shape_cast %89 : vector<4xf32> to vector<4x1xf32>
    %cst_36 = arith.constant 3.906250e-03 : f32
    %91 = vector.broadcast %cst_36 : f32 to vector<4x1xf32>
    %92 = arith.mulf %90, %91 : vector<4x1xf32>
    %93 = vector.broadcast %92 : vector<4x1xf32> to vector<4x256xf32>
    %94 = arith.subf %88, %93 : vector<4x256xf32>
    %95 = arith.mulf %94, %94 : vector<4x256xf32>
    %cst_37 = arith.constant dense<0.000000e+00> : vector<4xf32>
    %96 = vector.multi_reduction <add>, %95, %cst_37 [1] : vector<4x256xf32> to vector<4xf32>
    %97 = vector.shape_cast %96 : vector<4xf32> to vector<4x1xf32>
    %cst_38 = arith.constant 3.906250e-03 : f32
    %98 = vector.broadcast %cst_38 : f32 to vector<4x1xf32>
    %99 = arith.mulf %97, %98 : vector<4x1xf32>
    %cst_39 = arith.constant 9.99999974E-6 : f32
    %100 = vector.broadcast %cst_39 : f32 to vector<4x1xf32>
    %101 = arith.addf %99, %100 : vector<4x1xf32>
    %102 = math.rsqrt %101 : vector<4x1xf32>
    %103 = vector.broadcast %102 : vector<4x1xf32> to vector<4x256xf32>
    %104 = arith.mulf %94, %103 : vector<4x256xf32>
    %105 = arith.addf %104, %22 : vector<4x256xf32>
    %c0_40 = arith.constant 0 : index
    %c0_41 = arith.constant 0 : index
    %c0_42 = arith.constant 0 : index
    %106 = vector.load %arg6[%c0_40, %c0_41, %c0_42] : memref<1x4x256xf32, #tpu.memory_space<vmem>>, vector<1x4x256xf32>
    %107 = vector.shape_cast %106 : vector<1x4x256xf32> to vector<4x256xf32>
    %108 = vector.shape_cast %105 : vector<4x256xf32> to vector<1x4x256xf32>
    tpu.vector_store %arg6[%c0_40, %c0_41, %c0_42], %108 {strides = array<i32>} : memref<1x4x256xf32, #tpu.memory_space<vmem>>, vector<1x4x256xf32>,
    return
  }
  func.func @transform_0(%arg0: i32) -> (i32, i32, i32) {
    %c0_i32 = arith.constant 0 : i32
    %c0_i32_0 = arith.constant 0 : i32
    %c0_i32_1 = arith.constant 0 : i32
    return %arg0, %c0_i32, %c0_i32_0 : i32, i32, i32
  }
  func.func @transform_1(%arg0: i32) -> (i32, i32) {
    %c0_i32 = arith.constant 0 : i32
    %c0_i32_0 = arith.constant 0 : i32
    %c0_i32_1 = arith.constant 0 : i32
    return %c0_i32, %c0_i32_0 : i32, i32
  }
  func.func @transform_2(%arg0: i32) -> (i32, i32) {
    %c0_i32 = arith.constant 0 : i32
    %c0_i32_0 = arith.constant 0 : i32
    %c0_i32_1 = arith.constant 0 : i32
    return %c0_i32, %c0_i32_0 : i32, i32
  }
  func.func @transform_3(%arg0: i32) -> (i32, i32) {
    %c0_i32 = arith.constant 0 : i32
    %c0_i32_0 = arith.constant 0 : i32
    %c0_i32_1 = arith.constant 0 : i32
    return %c0_i32, %c0_i32_0 : i32, i32
  }
  func.func @transform_4(%arg0: i32) -> (i32, i32) {
    %c0_i32 = arith.constant 0 : i32
    %c0_i32_0 = arith.constant 0 : i32
    %c0_i32_1 = arith.constant 0 : i32
    return %c0_i32, %c0_i32_0 : i32, i32
  }
  func.func @transform_5(%arg0: i32) -> (i32, i32, i32) {
    %c0_i32 = arith.constant 0 : i32
    %c0_i32_0 = arith.constant 0 : i32
    %c0_i32_1 = arith.constant 0 : i32
    return %arg0, %c0_i32, %c0_i32_0 : i32, i32, i32
  }
}

</mosaic_0001>

<llo_original>
// kernel: resblock_forward.1
$region0: #{resblock_forward.1}
  #allocation0 [shape = 'u32[]', space=smem, size = 0x4, offset = 0x4, fixed_abs, tag = 'smem constant byte address 0x4 - core index']
  #allocation1 [shape = 'u32[72,128]{1,0:T(1,128)}', space=vmem, size = 0x9000, scoped, tag = 'internal scratch']
  %s0 = inlined_call_operand.vmem [shape: f32[2,4,256], index: 0, kind: input, shape index: {}]
  %s1 = inlined_call_operand.vmem [shape: f32[4,36], index: 1, kind: input, shape index: {}]
  %s2 = inlined_call_operand.vmem [shape: f32[4,1], index: 2, kind: input, shape index: {}]
  %s3 = inlined_call_operand.vmem [shape: f32[4,36], index: 3, kind: input, shape index: {}]
  %s4 = inlined_call_operand.vmem [shape: f32[4,1], index: 4, kind: input, shape index: {}]
  %s5 = inlined_call_operand.vmem [shape: f32[2,4,256], index: 5, kind: output, shape index: {}]
  %s6 = sld [smem:[#allocation0]]
  $region53: #{resblock_forward.1} parent=0
    _
  %s8 = ssub.s32 1, %s6
  %s9 = scalar_select 0, %s8, %s6
  loop: start=0, step=1, limit=4
  $region2: #{resblock_forward.1} parent=0 // loop_pre_header
    _
  $region3: #{resblock_forward.1} parent=0 // loop_header
    %s11 = sphi 0, %s15
    %p12 = scmp.ge.s32.totalorder %s11, 4
    %s21 = sphi 0, %s23
    %s24 = sphi 0, %s21
    %s25 = sphi 0, %s24
    %s41 = sphi 0, %s25
    %s45 = sphi 0, %s45
    %s47 = sphi 0, %s45
    %s48 = sphi 0, %s47
    %s62 = sphi 0, %s48
    %s66 = sphi 0, %s66
    %s68 = sphi 0, %s66
    %s69 = sphi 0, %s68
    %s83 = sphi 0, %s69
    %s87 = sphi 0, %s87
    %s89 = sphi 0, %s87
    %s90 = sphi 0, %s89
    %s104 = sphi 0, %s90
    %s108 = sphi 0, %s108
    %s110 = sphi 0, %s108
    %s111 = sphi 0, %s110
    %s125 = sphi 0, %s111
    %s131 = sphi 0, %s133
    %s134 = sphi 0, %s131
    %s135 = sphi 0, %s134
    %s151 = sphi 0, %s135
  $region4: #{resblock_forward.1} parent=0 // loop_header_branch
    %14 = sbr.rel (%p12) target = $region8
  $region5: #{resblock_forward.1} parent=0 // loop_body
    %s16 = ssub.s32 %s11, 1
    %s17 = ssub.s32 %s11, 2
    %s18 = sadd.s32 %s11, 1
    %s19 = ssub.s32 %s11, %s18
    %p20 = scmp.eq.s32.totalorder %s19, 0
    %s22 = sadd.s32 %s21, 1
    %s23 = scalar_select %p20, %s21, %s22
    %p26 = pneg %p20
    %p27 = scmp.eq.s32.totalorder %s11, 1
    %p28 = por %p26, %p27
    %p29 = scmp.ne.s32.totalorder %s21, %s24
    %p30 = scmp.eq.s32.totalorder %s11, 0
    %p31 = por %p29, %p30
    %p32 = scmp.ne.s32.totalorder %s21, %s24
    %p33 = scmp.eq.s32.totalorder %s16, 1
    %p34 = por %p32, %p33
    %p35 = scmp.ne.s32.totalorder %s24, %s25
    %p36 = scmp.eq.s32.totalorder %s16, 0
    %p37 = por %p35, %p36
    %p38 = scmp.ne.s32.totalorder %s24, %s25
    %p39 = scmp.eq.s32.totalorder %s17, 1
    %p40 = por %p38, %p39
    %p42 = scmp.ne.s32.totalorder %s25, %s41
    %p43 = scmp.eq.s32.totalorder %s17, 0
    %p44 = por %p42, %p43
    %s46 = sadd.s32 %s45, 1
    %p49 = scmp.eq.s32.totalorder %s11, 1
    %p50 = scmp.ne.s32.totalorder %s45, %s47
    %p51 = scmp.eq.s32.totalorder %s11, 0
    %p52 = por %p50, %p51
    %p53 = scmp.ne.s32.totalorder %s45, %s47
    %p54 = scmp.eq.s32.totalorder %s16, 1
    %p55 = por %p53, %p54
    %p56 = scmp.ne.s32.totalorder %s47, %s48
    %p57 = scmp.eq.s32.totalorder %s16, 0
    %p58 = por %p56, %p57
    %p59 = scmp.ne.s32.totalorder %s47, %s48
    %p60 = scmp.eq.s32.totalorder %s17, 1
    %p61 = por %p59, %p60
    %p63 = scmp.ne.s32.totalorder %s48, %s62
    %p64 = scmp.eq.s32.totalorder %s17, 0
    %p65 = por %p63, %p64
    %s67 = sadd.s32 %s66, 1
    %p70 = scmp.eq.s32.totalorder %s11, 1
    %p71 = scmp.ne.s32.totalorder %s66, %s68
    %p72 = scmp.eq.s32.totalorder %s11, 0
    %p73 = por %p71, %p72
    %p74 = scmp.ne.s32.totalorder %s66, %s68
    %p75 = scmp.eq.s32.totalorder %s16, 1
    %p76 = por %p74, %p75
    %p77 = scmp.ne.s32.totalorder %s68, %s69
    %p78 = scmp.eq.s32.totalorder %s16, 0
    %p79 = por %p77, %p78
    %p80 = scmp.ne.s32.totalorder %s68, %s69
    %p81 = scmp.eq.s32.totalorder %s17, 1
    %p82 = por %p80, %p81
    %p84 = scmp.ne.s32.totalorder %s69, %s83
    %p85 = scmp.eq.s32.totalorder %s17, 0
    %p86 = por %p84, %p85
    %s88 = sadd.s32 %s87, 1
    %p91 = scmp.eq.s32.totalorder %s11, 1
    %p92 = scmp.ne.s32.totalorder %s87, %s89
    %p93 = scmp.eq.s32.totalorder %s11, 0
    %p94 = por %p92, %p93
    %p95 = scmp.ne.s32.totalorder %s87, %s89
    %p96 = scmp.eq.s32.totalorder %s16, 1
    %p97 = por %p95, %p96
    %p98 = scmp.ne.s32.totalorder %s89, %s90
    %p99 = scmp.eq.s32.totalorder %s16, 0
    %p100 = por %p98, %p99
    %p101 = scmp.ne.s32.totalorder %s89, %s90
    %p102 = scmp.eq.s32.totalorder %s17, 1
    %p103 = por %p101, %p102
    %p105 = scmp.ne.s32.totalorder %s90, %s104
    %p106 = scmp.eq.s32.totalorder %s17, 0
    %p107 = por %p105, %p106
    %s109 = sadd.s32 %s108, 1
    %p112 = scmp.eq.s32.totalorder %s11, 1
    %p113 = scmp.ne.s32.totalorder %s108, %s110
    %p114 = scmp.eq.s32.totalorder %s11, 0
    %p115 = por %p113, %p114
    %p116 = scmp.ne.s32.totalorder %s108, %s110
    %p117 = scmp.eq.s32.totalorder %s16, 1
    %p118 = por %p116, %p117
    %p119 = scmp.ne.s32.totalorder %s110, %s111
    %p120 = scmp.eq.s32.totalorder %s16, 0
    %p121 = por %p119, %p120
    %p122 = scmp.ne.s32.totalorder %s110, %s111
    %p123 = scmp.eq.s32.totalorder %s17, 1
    %p124 = por %p122, %p123
    %p126 = scmp.ne.s32.totalorder %s111, %s125
    %p127 = scmp.eq.s32.totalorder %s17, 0
    %p128 = por %p126, %p127
    %s129 = ssub.s32 %s11, %s18
    %p130 = scmp.eq.s32.totalorder %s129, 0
    %s132 = sadd.s32 %s131, 1
    %s133 = scalar_select %p130, %s131, %s132
    %p136 = pneg %p130
    %p137 = scmp.eq.s32.totalorder %s11, 1
    %p138 = por %p136, %p137
    %p139 = scmp.ne.s32.totalorder %s131, %s134
    %p140 = scmp.eq.s32.totalorder %s11, 0
    %p141 = por %p139, %p140
    %p142 = scmp.ne.s32.totalorder %s131, %s134
    %p143 = scmp.eq.s32.totalorder %s16, 1
    %p144 = por %p142, %p143
    %p145 = scmp.ne.s32.totalorder %s134, %s135
    %p146 = scmp.eq.s32.totalorder %s16, 0
    %p147 = por %p145, %p146
    %p148 = scmp.ne.s32.totalorder %s134, %s135
    %p149 = scmp.eq.s32.totalorder %s17, 1
    %p150 = por %p148, %p149
    %p152 = scmp.ne.s32.totalorder %s135, %s151
    %p153 = scmp.eq.s32.totalorder %s17, 0
    %p154 = por %p152, %p153
    %p155 = scmp.le.s32.totalorder 1, %s11
    %p156 = scmp.lt.s32.totalorder %s11, 3
    %p157 = pnand %p155, %p156
    %p158 = pneg %p157
    // Predicated region
    $region9: #{resblock_forward.1} parent=5 // pred_check
      _
    $region10: #{resblock_forward.1} parent=5 // pred_check_branch
      %160 = sbr.rel (%p157) target = $region12
    $region11: #{resblock_forward.1} parent=5 // pred_region
      %s161 = ssub.s32 %s11, 1
      // Predicated region
      $region13: #{resblock_forward.1} parent=11 // pred_check
        %p162 = pneg %p58
      $region14: #{resblock_forward.1} parent=11 // pred_check_branch
        %164 = sbr.rel (%p162) target = $region16
      $region15: #{resblock_forward.1} parent=11 // pred_region
        _
      $region16: #{resblock_forward.1} parent=11 // pred_fallthru
        _
      // Predicated region
      $region17: #{resblock_forward.1} parent=11 // pred_check
        %p165 = pneg %p79
      $region18: #{resblock_forward.1} parent=11 // pred_check_branch
        %167 = sbr.rel (%p165) target = $region20
      $region19: #{resblock_forward.1} parent=11 // pred_region
        _
      $region20: #{resblock_forward.1} parent=11 // pred_fallthru
        _
      // Predicated region
      $region21: #{resblock_forward.1} parent=11 // pred_check
        %p168 = pneg %p100
      $region22: #{resblock_forward.1} parent=11 // pred_check_branch
        %170 = sbr.rel (%p168) target = $region24
      $region23: #{resblock_forward.1} parent=11 // pred_region
        _
      $region24: #{resblock_forward.1} parent=11 // pred_fallthru
        _
      // Predicated region
      $region25: #{resblock_forward.1} parent=11 // pred_check
        %p171 = pneg %p121
      $region26: #{resblock_forward.1} parent=11 // pred_check_branch
        %173 = sbr.rel (%p171) target = $region28
      $region27: #{resblock_forward.1} parent=11 // pred_region
        _
      $region28: #{resblock_forward.1} parent=11 // pred_fallthru
        _
    $region12: #{resblock_forward.1} parent=5 // pred_fallthru
      _
    %p174 = scmp.lt.s32.totalorder %s11, 2
    // Predicated region
    $region29: #{resblock_forward.1} parent=5 // pred_check
      %p175 = pneg %p174
    $region30: #{resblock_forward.1} parent=5 // pred_check_branch
      %177 = sbr.rel (%p175) target = $region32
    $region31: #{resblock_forward.1} parent=5 // pred_region
      // Predicated region
      $region33: #{resblock_forward.1} parent=31 // pred_check
        %p178 = pneg %p31
      $region34: #{resblock_forward.1} parent=31 // pred_check_branch
        %180 = sbr.rel (%p178) target = $region36
      $region35: #{resblock_forward.1} parent=31 // pred_region
        %p181 = scmp.lt.s32.totalorder %s11, 1
        %s182 = scalar_select %p181, %s11, 1
        %s183 = smul.addr %s182, 2
        %s184 = smul.addr %s183, 4
        %s185 = scalar_lea.vmem %s0, %s184
      $region36: #{resblock_forward.1} parent=31 // pred_fallthru
        _
    $region32: #{resblock_forward.1} parent=5 // pred_fallthru
      _
    %p186 = scmp.le.s32.totalorder 1, %s11
    %p187 = scmp.lt.s32.totalorder %s11, 3
    %p188 = pnand %p186, %p187
    %p189 = pneg %p188
    // Predicated region
    $region37: #{resblock_forward.1} parent=5 // pred_check
      _
    $region38: #{resblock_forward.1} parent=5 // pred_check_branch
      %191 = sbr.rel (%p188) target = $region40
    $region39: #{resblock_forward.1} parent=5 // pred_region
      %s192 = ssub.s32 %s11, 1
      %p193 = scmp.lt.s32.totalorder %s16, 1
      %s194 = scalar_select %p193, %s16, 1
      %s195 = smul.addr %s194, 2
      %s196 = smul.addr %s195, 4
      %s197 = scalar_lea.vmem %s0, %s196
      %p198 = pneg %p37
      %p199 = pneg %p34
      %p200 = pneg %p58
      %p201 = pneg %p55
      %p202 = pneg %p79
      %p203 = pneg %p76
      %p204 = pneg %p100
      %p205 = pneg %p97
      %p206 = pneg %p121
      %p207 = pneg %p118
      %p208 = pneg %p147
      %p209 = pneg %p144
      %p210 = scmp.lt.s32.totalorder %s16, 1
      %s211 = scalar_select %p210, %s16, 1
      %s212 = smul.addr %s211, 2
      %s213 = smul.addr %s212, 4
      %s214 = scalar_lea.vmem %s5, %s213
      %p215 = scmp.lt.s32.totalorder %s16, 1
      %s216 = scalar_select %p215, %s16, 1
      %s217 = smul.addr %s216, 2
      %s218 = smul.addr %s217, 4
      %s219 = scalar_lea.vmem %s0, %s218
      %p220 = scmp.lt.s32.totalorder %s16, 1
      %s221 = scalar_select %p220, %s16, 1
      %s222 = smul.addr %s221, 2
      %s223 = smul.addr %s222, 4
      %s224 = scalar_lea.vmem %s5, %s223
      %v225 = vlaneseq
      %v226 = vand.u32 %v225, 127
      %v227 = vadd.s32 %v226, 128
      %vm228 = vcmp.lt.s32.totalorder %v226, 0
      %v229 = vsub.s32 0, %v226
      %v230 = vsel %vm228, %v229, %v226
      %v231 = vshrl.u32 %v230, 4
      %v232 = vand.u32 %v230, 15
      %v233 = vsub.s32 0, %v232
      %v234 = vsel %vm228, %v233, %v232
      %vm235 = vcmp.lt.s32.totalorder %v227, 0
      %v236 = vsub.s32 0, %v227
      %v237 = vsel %vm235, %v236, %v227
      %v238 = vshrl.u32 %v237, 4
      %v239 = vand.u32 %v237, 15
      %v240 = vsub.s32 0, %v239
      %v241 = vsel %vm235, %v240, %v239
      %vm242 = vcmp.ne.s32.totalorder %v234, 0
      %vm243 = vcmp.ne.s32.totalorder %v241, 0
      %vm244 = vcmp.lt.s32.totalorder %v234, 0
      %vm245 = vcmp.lt.s32.totalorder %v241, 0
      %vm246 = vmand %vm244, %vm242
      %vm247 = vmand %vm245, %vm243
      %v248 = vadd.s32 %v234, 16
      %v249 = vadd.s32 %v241, 16
      %v250 = vsel %vm246, %v248, %v234
      %v251 = vsel %vm247, %v249, %v241
      %vm252 = vcmp.ne.s32.totalorder %v250, 0
      %vm253 = vcmp.ne.s32.totalorder %v251, 0
      %vm254 = vcmp.ne.s32.totalorder %v250, 15
      %vm255 = vcmp.ne.s32.totalorder %v251, 15
      %v256 = vld [vmem:[%s219] sm:$0xff]
      %258 = vst [vmem:[#allocation1] ss:$2 sm:$0xff] %v256
      %v259 = vld.sshfl [vmem:[#allocation1] sm:$0xff pattern:$0x75316420]
      %v260 = vld.sshfl [vmem:[#allocation1 + $0x8] sm:$0xff pattern:$0x75316420]
      %261 = vrot.lane.b32.xlu0 %v259, 1
      %v262 = vpop.permute.xlu0 %261
      %263 = vrot.lane.b32.xlu0 %v260, 1
      %v264 = vpop.permute.xlu0 %263
      %vm265 = vcmask 7168
      %v266 = vsel %vm265, %v262, %v264
      %v270 = vsel %vm265, 0.0, %v262
      %v271 = vsel %vm265, %v264, 0.0
      %v272 = vsel %vm252, 1, 0
      %v273 = vsel %vm253, 1, 0
      %vm274 = vcmp.eq.s32.totalorder %v272, 1
      %vm275 = vcmp.eq.s32.totalorder %v273, 1
      %v276 = vsel %vm274, %v270, 0.0
      %v277 = vsel %vm275, %v266, 0.0
      %v278 = vsel %vm254, 1, 0
      %v279 = vsel %vm255, 1, 0
      %vm280 = vcmp.eq.s32.totalorder %v278, 1
      %vm281 = vcmp.eq.s32.totalorder %v279, 1
      %284 = vrot.lane.b32.xlu0 %v270, 126
      %v285 = vpop.permute.xlu0 %284
      %286 = vrot.lane.b32.xlu0 %v266, 126
      %v287 = vpop.permute.xlu0 %286
      %288 = vrot.lane.b32.xlu0 %v271, 126
      %v289 = vpop.permute.xlu0 %288
      %vm290 = vcmask 1031168
      %v291 = vsel %vm290, %v285, %v287
      %v292 = vsel %vm290, %v287, %v289
      %v295 = vsel %vm280, %v291, 0.0
      %v296 = vsel %vm281, %v292, 0.0
      %s297 = scalar_lea.vmem [#allocation1], 1
      %298 = vst [vmem:[%s297] ss:$2 sm:$0xff] %v256
      %v299 = vld.sshfl [vmem:[#allocation1] sm:$0xff pattern:$0x75316420]
      %v300 = vld.sshfl [vmem:[#allocation1 + $0x8] sm:$0xff pattern:$0x75316420]
      %vm303 = vcmask 1043456
      %v304 = vsel %vm303, %v276, %v299
      %v305 = vsel %vm303, %v277, %v300
      %310 = vrot.lane.b32.xlu0 %v304, 16
      %v311 = vpop.permute.xlu0 %310
      %312 = vrot.lane.b32.xlu0 %v305, 16
      %v313 = vpop.permute.xlu0 %312
      %314 = vrot.lane.b32.xlu0 %v295, 16
      %v315 = vpop.permute.xlu0 %314
      %316 = vrot.lane.b32.xlu0 %v296, 16
      %v317 = vpop.permute.xlu0 %316
      %vm318 = vcmask 130048
      %v319 = vsel %vm318, %v311, %v313
      %v320 = vsel %vm318, %v315, %v317
      %v326 = vsel %vm318, 0.0, %v311
      %v327 = vsel %vm318, 0.0, %v315
      %v328 = vsel %vm318, %v313, 0.0
      %v329 = vsel %vm318, %v317, 0.0
      %v330 = vld [vmem:[%s1] sm:$0xf]
      %332 = vrot.lane.b32.xlu0 %v330, 116
      %v333 = vpop.permute.xlu0 %332
      %338 = vrot.lane.b32.xlu0 %v326, 112
      %v339 = vpop.permute.xlu0 %338
      %340 = vrot.lane.b32.xlu0 %v319, 112
      %v341 = vpop.permute.xlu0 %340
      %342 = vrot.lane.b32.xlu0 %v328, 112
      %v343 = vpop.permute.xlu0 %342
      %344 = vrot.lane.b32.xlu0 %v327, 112
      %v345 = vpop.permute.xlu0 %344
      %346 = vrot.lane.b32.xlu0 %v320, 112
      %v347 = vpop.permute.xlu0 %346
      %348 = vrot.lane.b32.xlu0 %v329, 112
      %v349 = vpop.permute.xlu0 %348
      %vm350 = vcmask 916480
      %v351 = vsel %vm350, %v339, %v341
      %v352 = vsel %vm350, %v341, %v343
      %v353 = vsel %vm350, %v345, %v347
      %v354 = vsel %vm350, %v347, %v349
      %vm357 = vcmask 97280
      %v358 = vsel %vm357, %v333, 0
      %v360 = vsel %vm303, %v353, 0
      %v362 = vsel %vm303, %v354, 0
      %364 = vmatpush.msra.mxu0 0.0
      %365 = vmatpush.msra.mxu0 0.0
      %366 = vmatpush.msra.mxu0 0.0
      %367 = vmatpush.msra.mxu0 0.0
      %368 = vmatpush.msra.mxu0 0.0
      %369 = vmatpush.msra.mxu0 0.0
      %370 = vmatpush.msra.mxu0 0.0
      %371 = vmatpush.msra.mxu0 0.0
      %372 = vmatpush.msra.mxu0 0.0
      %373 = vmatpush.msra.mxu0 0.0
      %374 = vmatpush.msra.mxu0 0.0
      %375 = vmatpush.msra.mxu0 0.0
      %376 = vmatpush.msra.mxu0 0.0
      %377 = vmatpush.msra.mxu0 0.0
      %378 = vmatpush.msra.mxu0 %v360
      %379 = vmatpush.msra.mxu0 %v351
      %380 = vmatmul.f32.gmra.mxu0 %v358
      %v381 = vpop.f32.mrf.mxu0
      %v382 = vadd.f32 0.0, %v381
      %383 = vdwg.mxu0
      %384 = vmatpush.msra.mxu0 0.0
      %385 = vmatpush.msra.mxu0 0.0
      %386 = vmatpush.msra.mxu0 0.0
      %387 = vmatpush.msra.mxu0 0.0
      %388 = vmatpush.msra.mxu0 0.0
      %389 = vmatpush.msra.mxu0 0.0
      %390 = vmatpush.msra.mxu0 0.0
      %391 = vmatpush.msra.mxu0 0.0
      %392 = vmatpush.msra.mxu0 0.0
      %393 = vmatpush.msra.mxu0 0.0
      %394 = vmatpush.msra.mxu0 0.0
      %395 = vmatpush.msra.mxu0 0.0
      %396 = vmatpush.msra.mxu0 0.0
      %397 = vmatpush.msra.mxu0 0.0
      %398 = vmatpush.msra.mxu0 %v362
      %399 = vmatpush.msra.mxu0 %v352
      %400 = vmatmul.f32.gmra.mxu0 %v358
      %v401 = vpop.f32.mrf.mxu0
      %v402 = vadd.f32 0.0, %v401
      %403 = vdwg.mxu0
      %v404 = vsel %vm357, %v330, 0
      %v406 = vsel %vm303, %v327, 0
      %v408 = vsel %vm303, %v320, 0
      %410 = vmatpush.msra.mxu0 0.0
      %411 = vmatpush.msra.mxu0 0.0
      %412 = vmatpush.msra.mxu0 0.0
      %413 = vmatpush.msra.mxu0 0.0
      %414 = vmatpush.msra.mxu0 0.0
      %415 = vmatpush.msra.mxu0 0.0
      %416 = vmatpush.msra.mxu0 0.0
      %417 = vmatpush.msra.mxu0 0.0
      %418 = vmatpush.msra.mxu0 0.0
      %419 = vmatpush.msra.mxu0 0.0
      %420 = vmatpush.msra.mxu0 0.0
      %421 = vmatpush.msra.mxu0 0.0
      %422 = vmatpush.msra.mxu0 0.0
      %423 = vmatpush.msra.mxu0 0.0
      %424 = vmatpush.msra.mxu0 %v406
      %425 = vmatpush.msra.mxu0 %v326
      %426 = vmatmul.f32.gmra.mxu0 %v404
      %v427 = vpop.f32.mrf.mxu0
      %v428 = vadd.f32 %v382, %v427
      %429 = vdwg.mxu0
      %430 = vmatpush.msra.mxu0 0.0
      %431 = vmatpush.msra.mxu0 0.0
      %432 = vmatpush.msra.mxu0 0.0
      %433 = vmatpush.msra.mxu0 0.0
      %434 = vmatpush.msra.mxu0 0.0
      %435 = vmatpush.msra.mxu0 0.0
      %436 = vmatpush.msra.mxu0 0.0
      %437 = vmatpush.msra.mxu0 0.0
      %438 = vmatpush.msra.mxu0 0.0
      %439 = vmatpush.msra.mxu0 0.0
      %440 = vmatpush.msra.mxu0 0.0
      %441 = vmatpush.msra.mxu0 0.0
      %442 = vmatpush.msra.mxu0 0.0
      %443 = vmatpush.msra.mxu0 0.0
      %444 = vmatpush.msra.mxu0 %v408
      %445 = vmatpush.msra.mxu0 %v319
      %446 = vmatmul.f32.gmra.mxu0 %v404
      %v447 = vpop.f32.mrf.mxu0
      %v448 = vadd.f32 %v402, %v447
      %449 = vdwg.mxu0
      %450 = vrot.lane.b32.xlu0 %v330, 104
      %v451 = vpop.permute.xlu0 %450
      %452 = vrot.lane.b32.xlu0 %v326, 96
      %v453 = vpop.permute.xlu0 %452
      %454 = vrot.lane.b32.xlu0 %v319, 96
      %v455 = vpop.permute.xlu0 %454
      %456 = vrot.lane.b32.xlu0 %v328, 96
      %v457 = vpop.permute.xlu0 %456
      %458 = vrot.lane.b32.xlu0 %v327, 96
      %v459 = vpop.permute.xlu0 %458
      %460 = vrot.lane.b32.xlu0 %v320, 96
      %v461 = vpop.permute.xlu0 %460
      %462 = vrot.lane.b32.xlu0 %v329, 96
      %v463 = vpop.permute.xlu0 %462
      %vm464 = vcmask 785408
      %v465 = vsel %vm464, %v453, %v455
      %v466 = vsel %vm464, %v455, %v457
      %v467 = vsel %vm464, %v459, %v461
      %v468 = vsel %vm464, %v461, %v463
      %v471 = vsel %vm357, %v451, 0
      %v473 = vsel %vm303, %v467, 0
      %v475 = vsel %vm303, %v468, 0
      %477 = vmatpush.msra.mxu0 0.0
      %478 = vmatpush.msra.mxu0 0.0
      %479 = vmatpush.msra.mxu0 0.0
      %480 = vmatpush.msra.mxu0 0.0
      %481 = vmatpush.msra.mxu0 0.0
      %482 = vmatpush.msra.mxu0 0.0
      %483 = vmatpush.msra.mxu0 0.0
      %484 = vmatpush.msra.mxu0 0.0
      %485 = vmatpush.msra.mxu0 0.0
      %486 = vmatpush.msra.mxu0 0.0
      %487 = vmatpush.msra.mxu0 0.0
      %488 = vmatpush.msra.mxu0 0.0
      %489 = vmatpush.msra.mxu0 0.0
      %490 = vmatpush.msra.mxu0 0.0
      %491 = vmatpush.msra.mxu0 %v473
      %492 = vmatpush.msra.mxu0 %v465
      %493 = vmatmul.f32.gmra.mxu0 %v471
      %v494 = vpop.f32.mrf.mxu0
      %v495 = vadd.f32 0.0, %v494
      %496 = vdwg.mxu0
      %497 = vmatpush.msra.mxu0 0.0
      %498 = vmatpush.msra.mxu0 0.0
      %499 = vmatpush.msra.mxu0 0.0
      %500 = vmatpush.msra.mxu0 0.0
      %501 = vmatpush.msra.mxu0 0.0
      %502 = vmatpush.msra.mxu0 0.0
      %503 = vmatpush.msra.mxu0 0.0
      %504 = vmatpush.msra.mxu0 0.0
      %505 = vmatpush.msra.mxu0 0.0
      %506 = vmatpush.msra.mxu0 0.0
      %507 = vmatpush.msra.mxu0 0.0
      %508 = vmatpush.msra.mxu0 0.0
      %509 = vmatpush.msra.mxu0 0.0
      %510 = vmatpush.msra.mxu0 0.0
      %511 = vmatpush.msra.mxu0 %v475
      %512 = vmatpush.msra.mxu0 %v466
      %513 = vmatmul.f32.gmra.mxu0 %v471
      %v514 = vpop.f32.mrf.mxu0
      %v515 = vadd.f32 0.0, %v514
      %516 = vdwg.mxu0
      %v517 = vadd.f32 %v428, %v495
      %v518 = vadd.f32 %v448, %v515
      %v519 = vld [vmem:[%s2] sm:$0xf]
      %521 = vset.pattern.permute.xlu0 0
      %522 = vperm.xlu0 %521, %v519
      %v523 = vpop.permute.xlu0 %522
      %v525 = vadd.f32 %v517, %v523
      %v526 = vadd.f32 %v518, %v523
      %v527 = vmax.f32 %v525, 0.0
      %v528 = vmax.f32 %v526, 0.0
      %531 = vrot.lane.b32.xlu0 %v527, 1
      %v532 = vpop.permute.xlu0 %531
      %533 = vrot.lane.b32.xlu0 %v528, 1
      %v534 = vpop.permute.xlu0 %533
      %v535 = vsel %vm265, %v532, %v534
      %v539 = vsel %vm265, 0.0, %v532
      %v540 = vsel %vm265, %v534, 0.0
      %v541 = vsel %vm274, %v539, 0.0
      %v542 = vsel %vm275, %v535, 0.0
      %545 = vrot.lane.b32.xlu0 %v539, 126
      %v546 = vpop.permute.xlu0 %545
      %547 = vrot.lane.b32.xlu0 %v535, 126
      %v548 = vpop.permute.xlu0 %547
      %549 = vrot.lane.b32.xlu0 %v540, 126
      %v550 = vpop.permute.xlu0 %549
      %v551 = vsel %vm290, %v546, %v548
      %v552 = vsel %vm290, %v548, %v550
      %v555 = vsel %vm280, %v551, 0.0
      %v556 = vsel %vm281, %v552, 0.0
      %v557 = vrot.slane %v527, 4
      %v558 = vrot.slane %v528, 4
      %v561 = vsel %vm303, %v541, %v557
      %v562 = vsel %vm303, %v542, %v558
      %567 = vrot.lane.b32.xlu0 %v561, 16
      %v568 = vpop.permute.xlu0 %567
      %569 = vrot.lane.b32.xlu0 %v562, 16
      %v570 = vpop.permute.xlu0 %569
      %571 = vrot.lane.b32.xlu0 %v555, 16
      %v572 = vpop.permute.xlu0 %571
      %573 = vrot.lane.b32.xlu0 %v556, 16
      %v574 = vpop.permute.xlu0 %573
      %v575 = vsel %vm318, %v568, %v570
      %v576 = vsel %vm318, %v572, %v574
      %v582 = vsel %vm318, 0.0, %v568
      %v583 = vsel %vm318, 0.0, %v572
      %v584 = vsel %vm318, %v570, 0.0
      %v585 = vsel %vm318, %v574, 0.0
      %v586 = vld [vmem:[%s3] sm:$0xf]
      %588 = vrot.lane.b32.xlu0 %v586, 116
      %v589 = vpop.permute.xlu0 %588
      %594 = vrot.lane.b32.xlu0 %v582, 112
      %v595 = vpop.permute.xlu0 %594
      %596 = vrot.lane.b32.xlu0 %v575, 112
      %v597 = vpop.permute.xlu0 %596
      %598 = vrot.lane.b32.xlu0 %v584, 112
      %v599 = vpop.permute.xlu0 %598
      %600 = vrot.lane.b32.xlu0 %v583, 112
      %v601 = vpop.permute.xlu0 %600
      %602 = vrot.lane.b32.xlu0 %v576, 112
      %v603 = vpop.permute.xlu0 %602
      %604 = vrot.lane.b32.xlu0 %v585, 112
      %v605 = vpop.permute.xlu0 %604
      %v606 = vsel %vm350, %v595, %v597
      %v607 = vsel %vm350, %v597, %v599
      %v608 = vsel %vm350, %v601, %v603
      %v609 = vsel %vm350, %v603, %v605
      %v612 = vsel %vm357, %v589, 0
      %v614 = vsel %vm303, %v608, 0
      %v616 = vsel %vm303, %v609, 0
      %618 = vmatpush.msra.mxu0 0.0
      %619 = vmatpush.msra.mxu0 0.0
      %620 = vmatpush.msra.mxu0 0.0
      %621 = vmatpush.msra.mxu0 0.0
      %622 = vmatpush.msra.mxu0 0.0
      %623 = vmatpush.msra.mxu0 0.0
      %624 = vmatpush.msra.mxu0 0.0
      %625 = vmatpush.msra.mxu0 0.0
      %626 = vmatpush.msra.mxu0 0.0
      %627 = vmatpush.msra.mxu0 0.0
      %628 = vmatpush.msra.mxu0 0.0
      %629 = vmatpush.msra.mxu0 0.0
      %630 = vmatpush.msra.mxu0 0.0
      %631 = vmatpush.msra.mxu0 0.0
      %632 = vmatpush.msra.mxu0 %v614
      %633 = vmatpush.msra.mxu0 %v606
      %634 = vmatmul.f32.gmra.mxu0 %v612
      %v635 = vpop.f32.mrf.mxu0
      %v636 = vadd.f32 0.0, %v635
      %637 = vdwg.mxu0
      %638 = vmatpush.msra.mxu0 0.0
      %639 = vmatpush.msra.mxu0 0.0
      %640 = vmatpush.msra.mxu0 0.0
      %641 = vmatpush.msra.mxu0 0.0
      %642 = vmatpush.msra.mxu0 0.0
      %643 = vmatpush.msra.mxu0 0.0
      %644 = vmatpush.msra.mxu0 0.0
      %645 = vmatpush.msra.mxu0 0.0
      %646 = vmatpush.msra.mxu0 0.0
      %647 = vmatpush.msra.mxu0 0.0
      %648 = vmatpush.msra.mxu0 0.0
      %649 = vmatpush.msra.mxu0 0.0
      %650 = vmatpush.msra.mxu0 0.0
      %651 = vmatpush.msra.mxu0 0.0
      %652 = vmatpush.msra.mxu0 %v616
      %653 = vmatpush.msra.mxu0 %v607
      %654 = vmatmul.f32.gmra.mxu0 %v612
      %v655 = vpop.f32.mrf.mxu0
      %v656 = vadd.f32 0.0, %v655
      %657 = vdwg.mxu0
      %v658 = vsel %vm357, %v586, 0
      %v660 = vsel %vm303, %v583, 0
      %v662 = vsel %vm303, %v576, 0
      %664 = vmatpush.msra.mxu0 0.0
      %665 = vmatpush.msra.mxu0 0.0
      %666 = vmatpush.msra.mxu0 0.0
      %667 = vmatpush.msra.mxu0 0.0
      %668 = vmatpush.msra.mxu0 0.0
      %669 = vmatpush.msra.mxu0 0.0
      %670 = vmatpush.msra.mxu0 0.0
      %671 = vmatpush.msra.mxu0 0.0
      %672 = vmatpush.msra.mxu0 0.0
      %673 = vmatpush.msra.mxu0 0.0
      %674 = vmatpush.msra.mxu0 0.0
      %675 = vmatpush.msra.mxu0 0.0
      %676 = vmatpush.msra.mxu0 0.0
      %677 = vmatpush.msra.mxu0 0.0
      %678 = vmatpush.msra.mxu0 %v660
      %679 = vmatpush.msra.mxu0 %v582
      %680 = vmatmul.f32.gmra.mxu0 %v658
      %v681 = vpop.f32.mrf.mxu0
      %v682 = vadd.f32 %v636, %v681
      %683 = vdwg.mxu0
      %684 = vmatpush.msra.mxu0 0.0
      %685 = vmatpush.msra.mxu0 0.0
      %686 = vmatpush.msra.mxu0 0.0
      %687 = vmatpush.msra.mxu0 0.0
      %688 = vmatpush.msra.mxu0 0.0
      %689 = vmatpush.msra.mxu0 0.0
      %690 = vmatpush.msra.mxu0 0.0
      %691 = vmatpush.msra.mxu0 0.0
      %692 = vmatpush.msra.mxu0 0.0
      %693 = vmatpush.msra.mxu0 0.0
      %694 = vmatpush.msra.mxu0 0.0
      %695 = vmatpush.msra.mxu0 0.0
      %696 = vmatpush.msra.mxu0 0.0
      %697 = vmatpush.msra.mxu0 0.0
      %698 = vmatpush.msra.mxu0 %v662
      %699 = vmatpush.msra.mxu0 %v575
      %700 = vmatmul.f32.gmra.mxu0 %v658
      %v701 = vpop.f32.mrf.mxu0
      %v702 = vadd.f32 %v656, %v701
      %703 = vdwg.mxu0
      %704 = vrot.lane.b32.xlu0 %v586, 104
      %v705 = vpop.permute.xlu0 %704
      %706 = vrot.lane.b32.xlu0 %v582, 96
      %v707 = vpop.permute.xlu0 %706
      %708 = vrot.lane.b32.xlu0 %v575, 96
      %v709 = vpop.permute.xlu0 %708
      %710 = vrot.lane.b32.xlu0 %v584, 96
      %v711 = vpop.permute.xlu0 %710
      %712 = vrot.lane.b32.xlu0 %v583, 96
      %v713 = vpop.permute.xlu0 %712
      %714 = vrot.lane.b32.xlu0 %v576, 96
      %v715 = vpop.permute.xlu0 %714
      %716 = vrot.lane.b32.xlu0 %v585, 96
      %v717 = vpop.permute.xlu0 %716
      %v718 = vsel %vm464, %v707, %v709
      %v719 = vsel %vm464, %v709, %v711
      %v720 = vsel %vm464, %v713, %v715
      %v721 = vsel %vm464, %v715, %v717
      %v724 = vsel %vm357, %v705, 0
      %v726 = vsel %vm303, %v720, 0
      %v728 = vsel %vm303, %v721, 0
      %730 = vmatpush.msra.mxu0 0.0
      %731 = vmatpush.msra.mxu0 0.0
      %732 = vmatpush.msra.mxu0 0.0
      %733 = vmatpush.msra.mxu0 0.0
      %734 = vmatpush.msra.mxu0 0.0
      %735 = vmatpush.msra.mxu0 0.0
      %736 = vmatpush.msra.mxu0 0.0
      %737 = vmatpush.msra.mxu0 0.0
      %738 = vmatpush.msra.mxu0 0.0
      %739 = vmatpush.msra.mxu0 0.0
      %740 = vmatpush.msra.mxu0 0.0
      %741 = vmatpush.msra.mxu0 0.0
      %742 = vmatpush.msra.mxu0 0.0
      %743 = vmatpush.msra.mxu0 0.0
      %744 = vmatpush.msra.mxu0 %v726
      %745 = vmatpush.msra.mxu0 %v718
      %746 = vmatmul.f32.gmra.mxu0 %v724
      %v747 = vpop.f32.mrf.mxu0
      %v748 = vadd.f32 0.0, %v747
      %749 = vdwg.mxu0
      %750 = vmatpush.msra.mxu0 0.0
      %751 = vmatpush.msra.mxu0 0.0
      %752 = vmatpush.msra.mxu0 0.0
      %753 = vmatpush.msra.mxu0 0.0
      %754 = vmatpush.msra.mxu0 0.0
      %755 = vmatpush.msra.mxu0 0.0
      %756 = vmatpush.msra.mxu0 0.0
      %757 = vmatpush.msra.mxu0 0.0
      %758 = vmatpush.msra.mxu0 0.0
      %759 = vmatpush.msra.mxu0 0.0
      %760 = vmatpush.msra.mxu0 0.0
      %761 = vmatpush.msra.mxu0 0.0
      %762 = vmatpush.msra.mxu0 0.0
      %763 = vmatpush.msra.mxu0 0.0
      %764 = vmatpush.msra.mxu0 %v728
      %765 = vmatpush.msra.mxu0 %v719
      %766 = vmatmul.f32.gmra.mxu0 %v724
      %v767 = vpop.f32.mrf.mxu0
      %v768 = vadd.f32 0.0, %v767
      %769 = vdwg.mxu0
      %v770 = vadd.f32 %v682, %v748
      %v771 = vadd.f32 %v702, %v768
      %v772 = vld [vmem:[%s4] sm:$0xf]
      %774 = vset.pattern.permute.xlu0 0
      %775 = vperm.xlu0 %774, %v772
      %v776 = vpop.permute.xlu0 %775
      %v778 = vadd.f32 %v770, %v776
      %v779 = vadd.f32 %v771, %v776
      %v780 = vmax.f32 %v778, 0.0
      %v781 = vmax.f32 %v779, 0.0
      %v782 = vsel %vm303, %v780, 0.0
      %v783 = vsel %vm303, %v781, 0.0
      %v784 = vadd.f32 %v782, %v783
      %785 = vadd.xlane.f32.xlu0 %v784
      %v786 = vpop.xlane.xlu0 %785
      %v787 = vmul.f32 %v786, 0.00390625
      %v788 = vsub.f32 %v780, %v787
      %v789 = vsub.f32 %v781, %v787
      %v790 = vmul.f32 %v788, %v788
      %v791 = vmul.f32 %v789, %v789
      %v792 = vsel %vm303, %v790, 0.0
      %v793 = vsel %vm303, %v791, 0.0
      %v794 = vadd.f32 %v792, %v793
      %795 = vadd.xlane.f32.xlu0 %v794
      %v796 = vpop.xlane.xlu0 %795
      %v797 = vmul.f32 %v796, 0.00390625
      %v798 = vadd.f32 %v797, 1e-05
      %v799 = vrsqrt.pop %v798
      %v800 = vmul.f32 %v799, %v798
      %v801 = vmul.f32 %v800, %v799
      %v802 = vmul.f32 0.5, %v801
      %v803 = vsub.f32 1.5, %v802
      %v804 = vmul.f32 %v799, %v803
      %vm805 = vweird.f32 %v798
      %vm806 = vweird.f32 %v799
      %vm807 = vmor %vm805, %vm806
      %v808 = vsel %vm807, %v799, %v804
      %v809 = vmul.f32 %v788, %v808
      %v810 = vmul.f32 %v789, %v808
      %811 = vst [vmem:[#allocation1] ss:$2 sm:$0xff] %v256
      %v812 = vld.sshfl [vmem:[#allocation1] sm:$0xff pattern:$0x75316420]
      %v813 = vld.sshfl [vmem:[#allocation1 + $0x8] sm:$0xff pattern:$0x75316420]
      %v816 = vadd.f32 %v809, %v812
      %v817 = vadd.f32 %v810, %v813
      %v820 = vrot.slane %v817, 4
      %v821 = vsel %vm303, %v816, %v820
      %823 = vst [vmem:[%s224] sm:$0xff] %v821
      %p824 = scmp.lt.s32.totalorder %s16, 1
      %s825 = scalar_select %p824, %s16, 1
      %s826 = smul.addr %s825, 2
      %s827 = smul.addr %s826, 4
      %s828 = scalar_lea.vmem %s5, %s827
      // Predicated region
      $region41: #{resblock_forward.1} parent=39 // pred_check
        %p829 = pneg %p144
      $region42: #{resblock_forward.1} parent=39 // pred_check_branch
        %831 = sbr.rel (%p829) target = $region44
      $region43: #{resblock_forward.1} parent=39 // pred_region
        _
      $region44: #{resblock_forward.1} parent=39 // pred_fallthru
        _
    $region40: #{resblock_forward.1} parent=5 // pred_fallthru
      _
    %p832 = scmp.le.s32.totalorder 2, %s11
    // Predicated region
    $region45: #{resblock_forward.1} parent=5 // pred_check
      %p833 = pneg %p832
    $region46: #{resblock_forward.1} parent=5 // pred_check_branch
      %835 = sbr.rel (%p833) target = $region48
    $region47: #{resblock_forward.1} parent=5 // pred_region
      %s836 = ssub.s32 %s11, 2
      // Predicated region
      $region49: #{resblock_forward.1} parent=47 // pred_check
        %p837 = pneg %p150
      $region50: #{resblock_forward.1} parent=47 // pred_check_branch
        %839 = sbr.rel (%p837) target = $region52
      $region51: #{resblock_forward.1} parent=47 // pred_region
        %p840 = scmp.lt.s32.totalorder %s17, 1
        %s841 = scalar_select %p840, %s17, 1
        %s842 = smul.addr %s841, 2
        %s843 = smul.addr %s842, 4
        %s844 = scalar_lea.vmem %s5, %s843
      $region52: #{resblock_forward.1} parent=47 // pred_fallthru
        _
    $region48: #{resblock_forward.1} parent=5 // pred_fallthru
      _
  $region6: #{resblock_forward.1} parent=0 // loop_footer
    %s15 = sadd.s32 1, %s11
  $region7: #{resblock_forward.1} parent=0 // loop_footer_branch
    %10 = sbr.rel target = $region3
  $region8: #{resblock_forward.1} parent=0 // loop_exit
    _

</llo_original>
